<compile_context>
chip_gen: v7x
topology: tpu7x:2x2x1
jax: 0.10.0
libtpu: 0.0.40
codegen_flags: <defaults>
</compile_context>

<pallas_src>
import functools

import jax
import jax.numpy as jnp
from jax.experimental import pallas as pl
from jax.experimental.pallas import tpu as pltpu

_NEG_INF = -1e30  # bias for pad columns -> exp() underflows to exactly 0


def _round_up(v, m):
    return (v + m - 1) // m * m


def _hier_kernel(n_leaf, node_pad, n_pad, x_ref, w_ref, b_ref,
                 node_out_ref, leaf_out_ref):
    # x: [TB, D_pad] bf16, w: [D_pad, Wtot] bf16 (resident), b: [1, Wtot] f32.
    # Single fused MXU matmul for node + all leaf classifiers.
    logits = jnp.dot(x_ref[...], w_ref[...],
                     preferred_element_type=jnp.float32) + b_ref[...]

    # ---- node softmax over its lane-padded slab (pad lanes -> exp == 0) ----
    node_logits = logits[:, :node_pad]
    nmax = jnp.max(node_logits, axis=-1, keepdims=True)
    nexp = jnp.exp(node_logits - nmax)
    ninv = pl.reciprocal(jnp.sum(nexp, axis=-1, keepdims=True), approx=True)
    node_pred = nexp * ninv
    node_out_ref[...] = node_pred                       # full-width lane-dense store

    # ---- per-leaf segment softmax ----
    # Each segment is a lane-aligned n_pad-wide slab, so every access below is
    # an unmasked full-vreg load/store.  N is small and static, so this loop
    # unrolls into a handful of full-width VPU/EUP ops.  (For very large N one
    # would switch to a single [TB, N, n_pad] reshape + vectorized softmax.)
    for i in range(n_leaf):
        lo = node_pad + i * n_pad
        seg = logits[:, lo:lo + n_pad]
        smax = jnp.max(seg, axis=-1, keepdims=True)
        sexp = jnp.exp(seg - smax)
        sinv = pl.reciprocal(jnp.sum(sexp, axis=-1, keepdims=True), approx=True)
        scale = node_pred[:, i:i + 1] * sinv            # node prob folded into one mul
        leaf_out_ref[:, i * n_pad:(i + 1) * n_pad] = sexp * scale


@functools.partial(jax.jit, static_argnames=("leaf_nums",))
def hierarchical_classifier(x, node_w, node_b, leaf_w, leaf_b, leaf_nums):
    """x: [B, D] f32; node_w: [D, N]; node_b: [N];
    leaf_w: [D, sum(leaf_nums)] (concatenated, pre-transposed); leaf_b: [sum].
    Returns (node_pred [B, N], leaf_preds [B, sum(leaf_nums)]) in f32."""
    B, D = x.shape
    N = len(leaf_nums)
    L = sum(leaf_nums)
    assert node_w.shape == (D, N) and leaf_w.shape == (D, L)

    node_pad = _round_up(N, 128)
    n_pad = _round_up(max(leaf_nums), 128)
    d_pad = _round_up(D, 8)
    w_tot = node_pad + N * n_pad

    # ---- pack node + leaf classifiers into one lane-padded bf16 weight ----
    w = jnp.zeros((d_pad, w_tot), jnp.float32)
    b = jnp.full((1, w_tot), _NEG_INF, jnp.float32)
    w = w.at[:D, :N].set(node_w)
    b = b.at[0, :N].set(node_b)
    off = 0
    for i, n in enumerate(leaf_nums):
        col = node_pad + i * n_pad
        w = w.at[:D, col:col + n].set(leaf_w[:, off:off + n])
        b = b.at[0, col:col + n].set(leaf_b[off:off + n])
        off += n
    w = w.astype(jnp.bfloat16)

    # ---- batch tiling ----
    TB = 256 if B >= 256 else _round_up(B, 8)
    B_pad = _round_up(B, TB)
    x_p = jnp.zeros((B_pad, d_pad), jnp.bfloat16)
    x_p = x_p.at[:B, :D].set(x.astype(jnp.bfloat16))

    kernel = functools.partial(_hier_kernel, N, node_pad, n_pad)

    # VMEM budget: resident bf16 weight + f32 bias + double-buffered x / out tiles.
    est = (d_pad * w_tot * 2 + w_tot * 4
           + 2 * TB * d_pad * 2
           + 2 * TB * (node_pad + N * n_pad) * 4)
    vmem_limit = int(min(max(4 * est, 8 << 20), 48 << 20))

    node_full, leaf_full = pl.pallas_call(
        kernel,
        out_shape=(
            jax.ShapeDtypeStruct((B_pad, node_pad), jnp.float32),
            jax.ShapeDtypeStruct((B_pad, N * n_pad), jnp.float32),
        ),
        grid=(B_pad // TB,),
        in_specs=[
            pl.BlockSpec((TB, d_pad), lambda bi: (bi, 0)),    # x tile (pipelined)
            pl.BlockSpec((d_pad, w_tot), lambda bi: (0, 0)),  # fused weight (resident)
            pl.BlockSpec((1, w_tot), lambda bi: (0, 0)),      # fused bias (resident)
        ],
        out_specs=(
            pl.BlockSpec((TB, node_pad), lambda bi: (bi, 0)),
            pl.BlockSpec((TB, N * n_pad), lambda bi: (bi, 0)),
        ),
        compiler_params=pltpu.CompilerParams(
            dimension_semantics=("parallel",),
            vmem_limit_bytes=vmem_limit,
        ),
    )(x_p, w, b)

    # plain XLA slices to recover the real (unpadded) columns / rows
    node_pred = node_full[:B, :N]
    leaf_preds = jnp.concatenate(
        [leaf_full[:B, i * n_pad:i * n_pad + n] for i, n in enumerate(leaf_nums)],
        axis=-1)
    return node_pred, leaf_preds


def reference_f32(x, node_w, node_b, leaf_w, leaf_b, leaf_nums):
    node_pred = jax.nn.softmax(x @ node_w + node_b, axis=-1)
    outs, off = [], 0
    for i, n in enumerate(leaf_nums):
        logits = x @ leaf_w[:, off:off + n] + leaf_b[off:off + n]
        outs.append(jax.nn.softmax(logits, axis=-1) * node_pred[:, i][:, None])
        off += n
    return node_pred, jnp.concatenate(outs, axis=-1)


def reference_bf16(x, node_w, node_b, leaf_w, leaf_b, leaf_nums):
    # Mirrors the kernel's arithmetic: bf16 matmul inputs, f32 accumulate/softmax.
    xb = x.astype(jnp.bfloat16)
    nw = node_w.astype(jnp.bfloat16)
    lw = leaf_w.astype(jnp.bfloat16)
    node_logits = jnp.dot(xb, nw, preferred_element_type=jnp.float32) + node_b
    node_pred = jax.nn.softmax(node_logits, axis=-1)
    outs, off = [], 0
    for i, n in enumerate(leaf_nums):
        logits = jnp.dot(xb, lw[:, off:off + n],
                         preferred_element_type=jnp.float32) + leaf_b[off:off + n]
        outs.append(jax.nn.softmax(logits, axis=-1) * node_pred[:, i][:, None])
        off += n
    return node_pred, jnp.concatenate(outs, axis=-1)


if __name__ == "__main__":
    B, D = 8, 32
    leaf_nums = (4, 6, 8)
    N, L = len(leaf_nums), sum(leaf_nums)

    key = jax.random.PRNGKey(0)
    k_x, k_nw, k_nb, k_lw, k_lb = jax.random.split(key, 5)
    x = jax.random.normal(k_x, (B, D), dtype=jnp.float32)
    node_w = jax.random.normal(k_nw, (D, N), dtype=jnp.float32) * 0.1
    node_b = jax.random.normal(k_nb, (N,), dtype=jnp.float32) * 0.1
    leaf_w = jax.random.normal(k_lw, (D, L), dtype=jnp.float32) * 0.1
    leaf_b = jax.random.normal(k_lb, (L,), dtype=jnp.float32) * 0.1

    node_pred, leaf_preds = hierarchical_classifier(
        x, node_w, node_b, leaf_w, leaf_b, leaf_nums=leaf_nums)
    jax.block_until_ready((node_pred, leaf_preds))

    assert node_pred.shape == (B, N) and leaf_preds.shape == (B, L)

    # exact-math check (same bf16 inputs as the kernel; slack covers approx recip)
    n_ref, l_ref = reference_bf16(x, node_w, node_b, leaf_w, leaf_b, leaf_nums)
    assert jnp.allclose(node_pred, n_ref, atol=5e-3, rtol=5e-3)
    assert jnp.allclose(leaf_preds, l_ref, atol=5e-3, rtol=5e-3)

    # fidelity check vs the full-f32 module semantics
    n32, l32 = reference_f32(x, node_w, node_b, leaf_w, leaf_b, leaf_nums)
    assert jnp.allclose(node_pred, n32, atol=3e-2, rtol=3e-2)
    assert jnp.allclose(leaf_preds, l32, atol=3e-2, rtol=3e-2)

    print("KERNEL_OK")
</pallas_src>

<mosaic_0001>
module attributes {stable_mosaic.version = 11 : i64} {
  func.func @_hier_kernel(%arg0: i32, %arg1: memref<8x32xbf16, #tpu.memory_space<vmem>>, %arg2: memref<32x512xbf16, #tpu.memory_space<vmem>>, %arg3: memref<1x512xf32, #tpu.memory_space<vmem>>, %arg4: memref<8x128xf32, #tpu.memory_space<vmem>>, %arg5: memref<8x384xf32, #tpu.memory_space<vmem>>) attributes {dimension_semantics = [#tpu.dimension_semantics<parallel>], iteration_bounds = array<i64: 1>, scalar_prefetch = 0 : i64, scratch_operands = 0 : i64, tpu.core_type = #tpu.core_type<tc>, window_params = [{transform_indices = @transform_0, window_bounds = array<i64: 8, 32>}, {pipeline_mode = #tpu.pipeline_mode<synchronous>, transform_indices = @transform_1, window_bounds = array<i64: 32, 512>}, {pipeline_mode = #tpu.pipeline_mode<synchronous>, transform_indices = @transform_2, window_bounds = array<i64: 1, 512>}, {transform_indices = @transform_3, window_bounds = array<i64: 8, 128>}, {transform_indices = @transform_4, window_bounds = array<i64: 8, 384>}]} {
    %c0 = arith.constant 0 : index
    %c0_0 = arith.constant 0 : index
    %0 = vector.load %arg1[%c0, %c0_0] : memref<8x32xbf16, #tpu.memory_space<vmem>>, vector<8x32xbf16>
    %c0_1 = arith.constant 0 : index
    %c0_2 = arith.constant 0 : index
    %1 = vector.load %arg2[%c0_1, %c0_2] : memref<32x512xbf16, #tpu.memory_space<vmem>>, vector<32x512xbf16>
    %cst = arith.constant dense<0.000000e+00> : vector<8x512xf32>
    %2 = tpu.matmul %0, %1, %cst {dimension_numbers = #tpu.dot_dimension_numbers<[1], [0], [0], [1], [0, 0, 1, 1], [], []>} : vector<8x32xbf16>, vector<32x512xbf16>, vector<8x512xf32> -> vector<8x512xf32>
    %c0_3 = arith.constant 0 : index
    %c0_4 = arith.constant 0 : index
    %3 = vector.load %arg3[%c0_3, %c0_4] : memref<1x512xf32, #tpu.memory_space<vmem>>, vector<1x512xf32>
    %4 = vector.broadcast %3 : vector<1x512xf32> to vector<8x512xf32>
    %5 = arith.addf %2, %4 : vector<8x512xf32>
    %6 = vector.extract_strided_slice %5 {offsets = [0, 0], sizes = [8, 128], strides = [1, 1]} : vector<8x512xf32> to vector<8x128xf32>
    %cst_5 = arith.constant dense<0xFF800000> : vector<8xf32>
    %7 = vector.multi_reduction <maximumf>, %6, %cst_5 [1] : vector<8x128xf32> to vector<8xf32>
    %8 = vector.shape_cast %7 : vector<8xf32> to vector<8x1xf32>
    %9 = vector.broadcast %8 : vector<8x1xf32> to vector<8x128xf32>
    %10 = arith.subf %6, %9 : vector<8x128xf32>
    %11 = math.exp %10 : vector<8x128xf32>
    %cst_6 = arith.constant dense<0.000000e+00> : vector<8xf32>
    %12 = vector.multi_reduction <add>, %11, %cst_6 [1] : vector<8x128xf32> to vector<8xf32>
    %13 = vector.shape_cast %12 : vector<8xf32> to vector<8x1xf32>
    %14 = tpu.reciprocal %13 {approx = true} : vector<8x1xf32> -> vector<8x1xf32>
    %15 = vector.broadcast %14 : vector<8x1xf32> to vector<8x128xf32>
    %16 = arith.mulf %11, %15 : vector<8x128xf32>
    %c0_7 = arith.constant 0 : index
    %c0_8 = arith.constant 0 : index
    %17 = vector.load %arg4[%c0_7, %c0_8] : memref<8x128xf32, #tpu.memory_space<vmem>>, vector<8x128xf32>
    tpu.vector_store %arg4[%c0_7, %c0_8], %16 {strides = array<i32>} : memref<8x128xf32, #tpu.memory_space<vmem>>, vector<8x128xf32>,
    %18 = vector.extract_strided_slice %5 {offsets = [0, 128], sizes = [8, 128], strides = [1, 1]} : vector<8x512xf32> to vector<8x128xf32>
    %cst_9 = arith.constant dense<0xFF800000> : vector<8xf32>
    %19 = vector.multi_reduction <maximumf>, %18, %cst_9 [1] : vector<8x128xf32> to vector<8xf32>
    %20 = vector.shape_cast %19 : vector<8xf32> to vector<8x1xf32>
    %21 = vector.broadcast %20 : vector<8x1xf32> to vector<8x128xf32>
    %22 = arith.subf %18, %21 : vector<8x128xf32>
    %23 = math.exp %22 : vector<8x128xf32>
    %cst_10 = arith.constant dense<0.000000e+00> : vector<8xf32>
    %24 = vector.multi_reduction <add>, %23, %cst_10 [1] : vector<8x128xf32> to vector<8xf32>
    %25 = vector.shape_cast %24 : vector<8xf32> to vector<8x1xf32>
    %26 = tpu.reciprocal %25 {approx = true} : vector<8x1xf32> -> vector<8x1xf32>
    %27 = vector.extract_strided_slice %16 {offsets = [0, 0], sizes = [8, 1], strides = [1, 1]} : vector<8x128xf32> to vector<8x1xf32>
    %28 = arith.mulf %27, %26 : vector<8x1xf32>
    %29 = vector.broadcast %28 : vector<8x1xf32> to vector<8x128xf32>
    %30 = arith.mulf %23, %29 : vector<8x128xf32>
    %c0_11 = arith.constant 0 : index
    %c0_12 = arith.constant 0 : index
    %31 = vector.load %arg5[%c0_11, %c0_12] : memref<8x384xf32, #tpu.memory_space<vmem>>, vector<8x128xf32>
    tpu.vector_store %arg5[%c0_11, %c0_12], %30 {strides = array<i32>} : memref<8x384xf32, #tpu.memory_space<vmem>>, vector<8x128xf32>,
    %32 = vector.extract_strided_slice %5 {offsets = [0, 256], sizes = [8, 128], strides = [1, 1]} : vector<8x512xf32> to vector<8x128xf32>
    %cst_13 = arith.constant dense<0xFF800000> : vector<8xf32>
    %33 = vector.multi_reduction <maximumf>, %32, %cst_13 [1] : vector<8x128xf32> to vector<8xf32>
    %34 = vector.shape_cast %33 : vector<8xf32> to vector<8x1xf32>
    %35 = vector.broadcast %34 : vector<8x1xf32> to vector<8x128xf32>
    %36 = arith.subf %32, %35 : vector<8x128xf32>
    %37 = math.exp %36 : vector<8x128xf32>
    %cst_14 = arith.constant dense<0.000000e+00> : vector<8xf32>
    %38 = vector.multi_reduction <add>, %37, %cst_14 [1] : vector<8x128xf32> to vector<8xf32>
    %39 = vector.shape_cast %38 : vector<8xf32> to vector<8x1xf32>
    %40 = tpu.reciprocal %39 {approx = true} : vector<8x1xf32> -> vector<8x1xf32>
    %41 = vector.extract_strided_slice %16 {offsets = [0, 1], sizes = [8, 1], strides = [1, 1]} : vector<8x128xf32> to vector<8x1xf32>
    %42 = arith.mulf %41, %40 : vector<8x1xf32>
    %43 = vector.broadcast %42 : vector<8x1xf32> to vector<8x128xf32>
    %44 = arith.mulf %37, %43 : vector<8x128xf32>
    %c0_15 = arith.constant 0 : index
    %c128 = arith.constant 128 : index
    %45 = vector.load %arg5[%c0_15, %c128] : memref<8x384xf32, #tpu.memory_space<vmem>>, vector<8x128xf32>
    tpu.vector_store %arg5[%c0_15, %c128], %44 {strides = array<i32>} : memref<8x384xf32, #tpu.memory_space<vmem>>, vector<8x128xf32>,
    %46 = vector.extract_strided_slice %5 {offsets = [0, 384], sizes = [8, 128], strides = [1, 1]} : vector<8x512xf32> to vector<8x128xf32>
    %cst_16 = arith.constant dense<0xFF800000> : vector<8xf32>
    %47 = vector.multi_reduction <maximumf>, %46, %cst_16 [1] : vector<8x128xf32> to vector<8xf32>
    %48 = vector.shape_cast %47 : vector<8xf32> to vector<8x1xf32>
    %49 = vector.broadcast %48 : vector<8x1xf32> to vector<8x128xf32>
    %50 = arith.subf %46, %49 : vector<8x128xf32>
    %51 = math.exp %50 : vector<8x128xf32>
    %cst_17 = arith.constant dense<0.000000e+00> : vector<8xf32>
    %52 = vector.multi_reduction <add>, %51, %cst_17 [1] : vector<8x128xf32> to vector<8xf32>
    %53 = vector.shape_cast %52 : vector<8xf32> to vector<8x1xf32>
    %54 = tpu.reciprocal %53 {approx = true} : vector<8x1xf32> -> vector<8x1xf32>
    %55 = vector.extract_strided_slice %16 {offsets = [0, 2], sizes = [8, 1], strides = [1, 1]} : vector<8x128xf32> to vector<8x1xf32>
    %56 = arith.mulf %55, %54 : vector<8x1xf32>
    %57 = vector.broadcast %56 : vector<8x1xf32> to vector<8x128xf32>
    %58 = arith.mulf %51, %57 : vector<8x128xf32>
    %c0_18 = arith.constant 0 : index
    %c256 = arith.constant 256 : index
    %59 = vector.load %arg5[%c0_18, %c256] : memref<8x384xf32, #tpu.memory_space<vmem>>, vector<8x128xf32>
    tpu.vector_store %arg5[%c0_18, %c256], %58 {strides = array<i32>} : memref<8x384xf32, #tpu.memory_space<vmem>>, vector<8x128xf32>,
    return
  }
  func.func @transform_0(%arg0: i32) -> (i32, i32) {
    %c0_i32 = arith.constant 0 : i32
    %c0_i32_0 = arith.constant 0 : i32
    return %arg0, %c0_i32 : i32, i32
  }
  func.func @transform_1(%arg0: i32) -> (i32, i32) {
    %c0_i32 = arith.constant 0 : i32
    %c0_i32_0 = arith.constant 0 : i32
    %c0_i32_1 = arith.constant 0 : i32
    return %c0_i32, %c0_i32_0 : i32, i32
  }
  func.func @transform_2(%arg0: i32) -> (i32, i32) {
    %c0_i32 = arith.constant 0 : i32
    %c0_i32_0 = arith.constant 0 : i32
    %c0_i32_1 = arith.constant 0 : i32
    return %c0_i32, %c0_i32_0 : i32, i32
  }
  func.func @transform_3(%arg0: i32) -> (i32, i32) {
    %c0_i32 = arith.constant 0 : i32
    %c0_i32_0 = arith.constant 0 : i32
    return %arg0, %c0_i32 : i32, i32
  }
  func.func @transform_4(%arg0: i32) -> (i32, i32) {
    %c0_i32 = arith.constant 0 : i32
    %c0_i32_0 = arith.constant 0 : i32
    return %arg0, %c0_i32 : i32, i32
  }
}

</mosaic_0001>

<llo_original>
// kernel: hierarchical_classifier.1
$region0: #{hierarchical_classifier.1}
  #allocation0 [shape = 'u32[]', space=smem, size = 0x4, offset = 0x4, fixed_abs, tag = 'smem constant byte address 0x4 - core index']
  #allocation1 [shape = 'u32[144,128]{1,0:T(1,128)}', space=vmem, size = 0x12000, scoped, tag = 'internal scratch']
  %s0 = inlined_call_operand.vmem [shape: bf16[8,32], index: 0, kind: input, shape index: {}]
  %s1 = inlined_call_operand.vmem [shape: bf16[32,512], index: 1, kind: input, shape index: {}]
  %s2 = inlined_call_operand.vmem [shape: f32[1,512], index: 2, kind: input, shape index: {}]
  %s3 = inlined_call_operand.vmem [shape: f32[8,128], index: 3, kind: output, shape index: {0}]
  %s4 = inlined_call_operand.vmem [shape: f32[8,384], index: 4, kind: output, shape index: {1}]
  %5 = xla_tuple %s3, %s4
  %s6 = sld [smem:[#allocation0]]
  $region30: #{hierarchical_classifier.1} parent=0
    _
  %s8 = ssub.s32 1, %s6
  %s9 = scalar_select 0, %s8, %s6
  // Predicated region
  $region2: #{hierarchical_classifier.1} parent=0 // pred_check
    _
  $region3: #{hierarchical_classifier.1} parent=0 // pred_check_branch
    %11 = sbr.rel (0) target = $region5
  $region4: #{hierarchical_classifier.1} parent=0 // pred_region
    _
  $region5: #{hierarchical_classifier.1} parent=0 // pred_fallthru
    _
  // Predicated region
  $region6: #{hierarchical_classifier.1} parent=0 // pred_check
    _
  $region7: #{hierarchical_classifier.1} parent=0 // pred_check_branch
    %13 = sbr.rel (0) target = $region9
  $region8: #{hierarchical_classifier.1} parent=0 // pred_region
    _
  $region9: #{hierarchical_classifier.1} parent=0 // pred_fallthru
    _
  // Predicated region
  $region10: #{hierarchical_classifier.1} parent=0 // pred_check
    _
  $region11: #{hierarchical_classifier.1} parent=0 // pred_check_branch
    %15 = sbr.rel (0) target = $region13
  $region12: #{hierarchical_classifier.1} parent=0 // pred_region
    _
  $region13: #{hierarchical_classifier.1} parent=0 // pred_fallthru
    _
  %v17 = vld [vmem:[%s0] sm:$0xf]
  %v18 = vld [vmem:[%s1] sm:$0xff]
  %v19 = vld [vmem:[%s1 + $0x8] sm:$0xff]
  %v20 = vld [vmem:[%s1 + $0x10] sm:$0xff]
  %v21 = vld [vmem:[%s1 + $0x18] sm:$0xff]
  %v22 = vld [vmem:[%s1 + $0x20] sm:$0xff]
  %v23 = vld [vmem:[%s1 + $0x28] sm:$0xff]
  %v24 = vld [vmem:[%s1 + $0x30] sm:$0xff]
  %v25 = vld [vmem:[%s1 + $0x38] sm:$0xff]
  %v26 = vld [vmem:[%s2] sm:$0xf]
  %v28 = vlaneseq
  %v29 = vshrl.u32 %v28, 7
  %v30 = vsub.s32 0, %v29
  %v31 = vrot.slane %v26, %v30
  %v32 = vlaneseq
  %v33 = vshrl.u32 %v32, 7
  %v34 = vsub.s32 1, %v33
  %v35 = vrot.slane %v26, %v34
  %v36 = vlaneseq
  %v37 = vshrl.u32 %v36, 7
  %v38 = vsub.s32 2, %v37
  %v39 = vrot.slane %v26, %v38
  %v40 = vlaneseq
  %v41 = vshrl.u32 %v40, 7
  %v42 = vsub.s32 3, %v41
  %v43 = vrot.slane %v26, %v42
  %v56 = vunpack.c.l.b16 %v18
  %v57 = vunpack.c.h.b16 %v18
  %v58 = vunpack.c.l.b16 %v19
  %v59 = vunpack.c.h.b16 %v19
  %v60 = vunpack.c.l.b16 %v20
  %v61 = vunpack.c.h.b16 %v20
  %v62 = vunpack.c.l.b16 %v21
  %v63 = vunpack.c.h.b16 %v21
  %v64 = vunpack.c.l.b16 %v22
  %v65 = vunpack.c.h.b16 %v22
  %v66 = vunpack.c.l.b16 %v23
  %v67 = vunpack.c.h.b16 %v23
  %v68 = vunpack.c.l.b16 %v24
  %v69 = vunpack.c.h.b16 %v24
  %v70 = vunpack.c.l.b16 %v25
  %v71 = vunpack.c.h.b16 %v25
  %v72 = vpack.c.b16 %v60, %v56
  %v73 = vpack.c.b16 %v61, %v57
  %v74 = vpack.c.b16 %v62, %v58
  %v75 = vpack.c.b16 %v63, %v59
  %v76 = vpack.c.b16 %v68, %v64
  %v77 = vpack.c.b16 %v69, %v65
  %v78 = vpack.c.b16 %v70, %v66
  %v79 = vpack.c.b16 %v71, %v67
  %vm88 = vcmask 261120
  %v90 = vsel %vm88, %v17, 0
  %92 = vmatprep.subr.bf16.mxu0 %v73
  %93 = vmatpush1.bf16.msra.mxu0 %v72
  %94 = vmatprep.subr.bf16.mxu0 %v77
  %95 = vmatpush1.bf16.msra.mxu0 %v76
  %96 = vmatprep.subr.bf16.mxu0 0
  %97 = vmatpush1.bf16.msra.mxu0 0
  %98 = vmatprep.subr.bf16.mxu0 0
  %99 = vmatpush1.bf16.msra.mxu0 0
  %100 = vmatprep.subr.bf16.mxu0 0
  %101 = vmatpush1.bf16.msra.mxu0 0
  %102 = vmatprep.subr.bf16.mxu0 0
  %103 = vmatpush1.bf16.msra.mxu0 0
  %104 = vmatprep.subr.bf16.mxu0 0
  %105 = vmatpush1.bf16.msra.mxu0 0
  %106 = vmatprep.subr.bf16.mxu0 0
  %107 = vmatpush1.bf16.msra.mxu0 0
  %108 = vmatprep.subr.bf16.mxu0 0
  %109 = vmatpush1.bf16.msra.mxu0 0
  %110 = vmatprep.subr.bf16.mxu0 0
  %111 = vmatpush1.bf16.msra.mxu0 0
  %112 = vmatprep.subr.bf16.mxu0 0
  %113 = vmatpush1.bf16.msra.mxu0 0
  %114 = vmatprep.subr.bf16.mxu0 0
  %115 = vmatpush1.bf16.msra.mxu0 0
  %116 = vmatprep.subr.bf16.mxu0 0
  %117 = vmatpush1.bf16.msra.mxu0 0
  %118 = vmatprep.subr.bf16.mxu0 0
  %119 = vmatpush1.bf16.msra.mxu0 0
  %120 = vmatprep.subr.bf16.mxu0 0
  %121 = vmatpush1.bf16.msra.mxu0 0
  %122 = vmatprep.subr.bf16.mxu0 0
  %123 = vmatpush1.bf16.msra.mxu0 0
  %124 = vmatprep.mubr.bf16.mxu0 0
  %125 = vmatmul.mubr.bf16.gmra.mrb[0].mxu0 %v90
  %v126 = vpop.f32.mrb[0].mxu0
  %v127 = vadd.f32 %v31, %v126
  %v128 = vpop.f32.mrb[0].mxu0
  %v129 = vadd.f32 %v35, %v128
  %v130 = vpop.f32.mrb[0].mxu0
  %v131 = vpop.f32.mrb[0].mxu0
  %132 = vdwg.mxu0
  %133 = vmatprep.subr.bf16.mxu0 %v75
  %134 = vmatpush1.bf16.msra.mxu0 %v74
  %135 = vmatprep.subr.bf16.mxu0 %v79
  %136 = vmatpush1.bf16.msra.mxu0 %v78
  %137 = vmatprep.subr.bf16.mxu0 0
  %138 = vmatpush1.bf16.msra.mxu0 0
  %139 = vmatprep.subr.bf16.mxu0 0
  %140 = vmatpush1.bf16.msra.mxu0 0
  %141 = vmatprep.subr.bf16.mxu0 0
  %142 = vmatpush1.bf16.msra.mxu0 0
  %143 = vmatprep.subr.bf16.mxu0 0
  %144 = vmatpush1.bf16.msra.mxu0 0
  %145 = vmatprep.subr.bf16.mxu0 0
  %146 = vmatpush1.bf16.msra.mxu0 0
  %147 = vmatprep.subr.bf16.mxu0 0
  %148 = vmatpush1.bf16.msra.mxu0 0
  %149 = vmatprep.subr.bf16.mxu0 0
  %150 = vmatpush1.bf16.msra.mxu0 0
  %151 = vmatprep.subr.bf16.mxu0 0
  %152 = vmatpush1.bf16.msra.mxu0 0
  %153 = vmatprep.subr.bf16.mxu0 0
  %154 = vmatpush1.bf16.msra.mxu0 0
  %155 = vmatprep.subr.bf16.mxu0 0
  %156 = vmatpush1.bf16.msra.mxu0 0
  %157 = vmatprep.subr.bf16.mxu0 0
  %158 = vmatpush1.bf16.msra.mxu0 0
  %159 = vmatprep.subr.bf16.mxu0 0
  %160 = vmatpush1.bf16.msra.mxu0 0
  %161 = vmatprep.subr.bf16.mxu0 0
  %162 = vmatpush1.bf16.msra.mxu0 0
  %163 = vmatprep.subr.bf16.mxu0 0
  %164 = vmatpush1.bf16.msra.mxu0 0
  %165 = vmatprep.mubr.bf16.mxu0 0
  %166 = vmatmul.mubr.bf16.gmra.mrb[0].mxu0 %v90
  %v167 = vpop.f32.mrb[0].mxu0
  %v168 = vadd.f32 %v39, %v167
  %v169 = vpop.f32.mrb[0].mxu0
  %v170 = vadd.f32 %v43, %v169
  %v171 = vpop.f32.mrb[0].mxu0
  %v172 = vpop.f32.mrb[0].mxu0
  %173 = vdwg.mxu0
  %174 = vmax.xlane.f32.xlu0 %v127
  %v175 = vpop.xlane.xlu0 %174
  %v176 = vsub.f32 %v127, %v175
  %v177 = vmul.f32 %v176, 1.442695
  %v178 = vpow.pop %v177
  %179 = vadd.xlane.f32.xlu0 %v178
  %v180 = vpop.xlane.xlu0 %179
  %v181 = vrcp.pop %v180
  %v182 = vmul.f32 %v178, %v181
  %183 = vst [vmem:[%s3] sm:$0xff] %v182
  %184 = vmax.xlane.f32.xlu0 %v129
  %v185 = vpop.xlane.xlu0 %184
  %v186 = vsub.f32 %v129, %v185
  %v187 = vmul.f32 %v186, 1.442695
  %v188 = vpow.pop %v187
  %189 = vadd.xlane.f32.xlu0 %v188
  %v190 = vpop.xlane.xlu0 %189
  %v191 = vrcp.pop %v190
  %v192 = vmul.f32 %v182, %v191
  %194 = vset.pattern.permute.xlu0 0
  %195 = vperm.xlu0 %194, %v192
  %v196 = vpop.permute.xlu0 %195
  %v198 = vmul.f32 %v188, %v196
  %199 = vst [vmem:[%s4] sm:$0xff] %v198
  %200 = vmax.xlane.f32.xlu0 %v168
  %v201 = vpop.xlane.xlu0 %200
  %v202 = vsub.f32 %v168, %v201
  %v203 = vmul.f32 %v202, 1.442695
  %v204 = vpow.pop %v203
  %205 = vadd.xlane.f32.xlu0 %v204
  %v206 = vpop.xlane.xlu0 %205
  %v207 = vrcp.pop %v206
  %v208 = vmul.f32 %v182, %v207
  %210 = vset.pattern.permute.xlu0 1
  %211 = vperm.xlu0 %210, %v208
  %v212 = vpop.permute.xlu0 %211
  %v214 = vmul.f32 %v204, %v212
  %215 = vst [vmem:[%s4 + $0x8] sm:$0xff] %v214
  %216 = vmax.xlane.f32.xlu0 %v170
  %v217 = vpop.xlane.xlu0 %216
  %v218 = vsub.f32 %v170, %v217
  %v219 = vmul.f32 %v218, 1.442695
  %v220 = vpow.pop %v219
  %221 = vadd.xlane.f32.xlu0 %v220
  %v222 = vpop.xlane.xlu0 %221
  %v223 = vrcp.pop %v222
  %v224 = vmul.f32 %v182, %v223
  %226 = vset.pattern.permute.xlu0 2
  %227 = vperm.xlu0 %226, %v224
  %v228 = vpop.permute.xlu0 %227
  %v230 = vmul.f32 %v220, %v228
  %231 = vst [vmem:[%s4 + $0x10] sm:$0xff] %v230
  // Predicated region
  $region14: #{hierarchical_classifier.1} parent=0 // pred_check
    _
  $region15: #{hierarchical_classifier.1} parent=0 // pred_check_branch
    %233 = sbr.rel (0) target = $region17
  $region16: #{hierarchical_classifier.1} parent=0 // pred_region
    _
  $region17: #{hierarchical_classifier.1} parent=0 // pred_fallthru
    _
  // Predicated region
  $region18: #{hierarchical_classifier.1} parent=0 // pred_check
    _
  $region19: #{hierarchical_classifier.1} parent=0 // pred_check_branch
    %235 = sbr.rel (0) target = $region21
  $region20: #{hierarchical_classifier.1} parent=0 // pred_region
    _
  $region21: #{hierarchical_classifier.1} parent=0 // pred_fallthru
    _
  // Predicated region
  $region22: #{hierarchical_classifier.1} parent=0 // pred_check
    _
  $region23: #{hierarchical_classifier.1} parent=0 // pred_check_branch
    %237 = sbr.rel (0) target = $region25
  $region24: #{hierarchical_classifier.1} parent=0 // pred_region
    _
  $region25: #{hierarchical_classifier.1} parent=0 // pred_fallthru
    _
  // Predicated region
  $region26: #{hierarchical_classifier.1} parent=0 // pred_check
    _
  $region27: #{hierarchical_classifier.1} parent=0 // pred_check_branch
    %239 = sbr.rel (0) target = $region29
  $region28: #{hierarchical_classifier.1} parent=0 // pred_region
    _
  $region29: #{hierarchical_classifier.1} parent=0 // pred_fallthru
    _

</llo_original>
